<compile_context>
chip_gen: v6e
topology: v6e:2x2x1
jax: 0.10.0
libtpu: 0.0.40
codegen_flags: <defaults>
</compile_context>

<pallas_src>
import numpy as np
import jax
import jax.numpy as jnp
from jax import lax
from jax.experimental import pallas as pl
from jax.experimental.pallas import tpu as pltpu


# ----------------------------- Pallas kernels ------------------------------

def _linear_kernel_factory(relu_out: bool):
    """bf16 x bf16 GEMM with f32 accumulation; bias add / ReLU in f32."""
    def kernel(x_ref, w_ref, b_ref, o_ref):
        xv = x_ref[...].astype(jnp.bfloat16)          # MXU-native input dtype
        acc = jnp.dot(xv, w_ref[...], preferred_element_type=jnp.float32)
        acc = acc + b_ref[...]                        # bias in f32
        if relu_out:
            acc = jnp.maximum(acc, 0.0)               # fused output ReLU (f32)
        o_ref[...] = acc.astype(o_ref.dtype)
    return kernel


def pallas_linear(x, w_bf16, b, *, tn=None, tm=None, relu_out=False):
    """y = relu?(x @ w + b).

    x      : (M, K) float32 activations (cast to bf16 inside the kernel).
    w_bf16 : (K, N) bfloat16 weights (PyTorch (N, K) pre-transposed).
    b      : (N,)   float32 bias.
    Grid is (M//tm, N//tn), both 'parallel' (megacore-shardable on v7x).
    """
    M, K = x.shape
    Kw, N = w_bf16.shape
    assert K == Kw
    if tn is None or tn > N:
        tn = N
    if tm is None or tm > M:
        tm = M
    assert N % tn == 0 and M % tm == 0

    kernel = _linear_kernel_factory(relu_out)
    cost = pl.CostEstimate(
        flops=2 * M * K * N,
        transcendentals=0,
        bytes_accessed=int(M * K * 4 + K * N * 2 + N * 4 + M * N * 4),
    )
    return pl.pallas_call(
        kernel,
        out_shape=jax.ShapeDtypeStruct((M, N), jnp.float32),
        grid=(M // tm, N // tn),
        in_specs=[
            pl.BlockSpec((tm, K), lambda i, j: (i, 0)),   # activations
            pl.BlockSpec((K, tn), lambda i, j: (0, j)),   # bf16 weight tile (streamed over N)
            pl.BlockSpec((1, tn), lambda i, j: (0, j)),   # bias tile (f32)
        ],
        out_specs=pl.BlockSpec((tm, tn), lambda i, j: (i, j)),
        compiler_params=pltpu.CompilerParams(
            dimension_semantics=("parallel", "parallel")),
        cost_estimate=cost,
    )(x, w_bf16, b.reshape(1, N))


def pallas_maxpool_window(x3d):
    """(R, Wwin, C) -> (R, C): max over the pooling window.

    Channels (C=512) stay on the lane axis, so loads/stores are lane-dense and
    the reduction is plain VPU work over the sublane/window axis.
    """
    R, Wwin, C = x3d.shape

    def kernel(x_ref, o_ref):
        v = x_ref[:, 0, :]
        for k in range(1, Wwin):          # unrolled maximum over the 2x2x2 window
            v = jnp.maximum(v, x_ref[:, k, :])
        o_ref[...] = v

    return pl.pallas_call(
        kernel,
        out_shape=jax.ShapeDtypeStruct((R, C), x3d.dtype),
        grid=(1,),
        in_specs=[pl.BlockSpec((R, Wwin, C), lambda i: (0, 0, 0))],
        out_specs=pl.BlockSpec((R, C), lambda i: (0, 0)),
    )(x3d)


# ------------------------------ feature stage ------------------------------

def features_forward(x, conv_w_gemm, conv_b):
    """Conv3d(k=3,pad=1) + ReLU + MaxPool3d(2), channels-last.

    Returns (B * D/2 * H/2 * W/2, 512) with rows ordered (b, do, ho, wo) and
    channels on the lane axis (no transposes of the big conv output).
    """
    B, C, D, H, W = x.shape
    Kp, O = conv_w_gemm.shape
    x_cl = jnp.transpose(x, (0, 2, 3, 4, 1))                     # one-time NCDHW -> NDHWC
    xp = jnp.pad(x_cl, ((0, 0), (1, 1), (1, 1), (1, 1), (0, 0)))
    # TODO(synk): for realistic spatial sizes replace this host-side im2col with
    # an in-kernel accumulation over the 27 taps (grid axis marked 'arbitrary').
    taps = [xp[:, kd:kd + D, kh:kh + H, kw:kw + W, :]
            for kd in range(3) for kh in range(3) for kw in range(3)]
    p = jnp.stack(taps, axis=-1)                                 # (B,D,H,W,C,27); K index = c*27+tap
    # Row order (b, do, ho, wo, di, hi, wi): the pool window becomes contiguous,
    # so the conv output needs only a reshape (no transpose) before pooling.
    p = p.reshape(B, D // 2, 2, H // 2, 2, W // 2, 2, C * 27)
    p = p.transpose(0, 1, 3, 5, 2, 4, 6, 7)
    M = B * (D // 2) * (H // 2) * (W // 2) * 8
    p = p.reshape(M, C * 27)
    p = jnp.pad(p, ((0, 0), (0, Kp - C * 27)))                   # pad K 108 -> 128 (MXU-aligned)

    y = pallas_linear(p, conv_w_gemm, conv_b, relu_out=True)     # conv-as-GEMM + bias + ReLU
    n_out = B * (D // 2) * (H // 2) * (W // 2)
    y = y.reshape(n_out, 8, O)                                   # (rows, 2x2x2 window, 512)
    return pallas_maxpool_window(y)                              # (rows, 512), lane-dense


# ------------------------------ full forward -------------------------------

def vgg3d_forward(x, params):
    B = x.shape[0]
    pooled = features_forward(x, params["conv_w_gemm"], params["conv_b"])
    flat = pooled.reshape(B, -1)     # channels-last flatten; w1 rows pre-permuted to match

    # classifier: Linear(4096,4096) -> ReLU -> Dropout(identity) -> Linear(4096,4096)
    h = pallas_linear(flat, params["w1_t"], params["b1"], tn=512, relu_out=True)
    # classifier1's leading ReLU fused here as relu_out (h is not needed elsewhere).
    h = pallas_linear(h, params["w2_t"], params["b2"], tn=512, relu_out=True)
    # TODO(synk): Dropout is stochastic in training mode; modeled as identity (eval).
    # Final Linear: N padded 10 -> 128 for lane-dense stores; slice back outside.
    x1 = pallas_linear(h, params["w3_t"], params["b3"], tn=128)
    return x1[:, :params["num_classes"]]


# ---------------------------------- main -----------------------------------

if __name__ == "__main__":
    key = jax.random.PRNGKey(0)
    kx, kc, k1, k2, k3 = jax.random.split(key, 5)

    B, C, S = 2, 4, 4            # small input: (2, 4, 4, 4, 4) NCDHW
    num_classes = 10
    FEAT = 512 * 2 * 2 * 2       # 4096, fixed by the module definition

    x = jax.random.normal(kx, (B, C, S, S, S), jnp.float32)

    # Deterministic synthetic parameters (shapes dictated by the module):
    #   Linear: weight ~ N(0, 0.01), bias = 0   (matches _initialize_weights)
    #   Conv3d: kaiming-style normal (fan_out), bias = 0
    conv_w = jax.random.normal(kc, (512, C, 3, 3, 3), jnp.float32) * np.sqrt(2.0 / (512 * 27))
    conv_b = jnp.zeros((512,), jnp.float32)
    w1 = jax.random.normal(k1, (4096, FEAT), jnp.float32) * 0.01
    w2 = jax.random.normal(k2, (4096, 4096), jnp.float32) * 0.01
    w3 = jax.random.normal(k3, (num_classes, 4096), jnp.float32) * 0.01
    b1 = jnp.zeros((4096,), jnp.float32)
    b2 = jnp.zeros((4096,), jnp.float32)
    b3 = jnp.zeros((num_classes,), jnp.float32)

    # -------- one-time (offline) parameter prep --------
    KC = C * 27
    # Conv weight as K-major GEMM matrix, K padded 108 -> 128, bf16.
    conv_w_gemm = jnp.pad(conv_w.reshape(512, KC).T,
                          ((0, 128 - KC), (0, 0))).astype(jnp.bfloat16)
    # w1: fold PyTorch NCDHW-flatten order (c*8+p) vs channels-last (p*512+c)
    # into a row permutation of the transposed weight.
    w1_t = w1.T                                                  # (in=c*8+p, out)
    w1_t_cl = w1_t.reshape(512, 8, 4096).transpose(1, 0, 2).reshape(4096, 4096)
    # Final layer: pad output dim 10 -> 128 (lane-dense).
    w3_t_pad = jnp.pad(w3.T, ((0, 0), (0, 128 - num_classes)))
    b3_pad = jnp.pad(b3, (0, 128 - num_classes))

    params = dict(
        conv_w_gemm=conv_w_gemm, conv_b=conv_b,
        w1_t=w1_t_cl.astype(jnp.bfloat16), b1=b1,
        w2_t=w2.T.astype(jnp.bfloat16), b2=b2,
        w3_t=w3_t_pad.astype(jnp.bfloat16), b3=b3_pad,
        num_classes=num_classes,
    )

    out = jax.block_until_ready(vgg3d_forward(x, params))
    assert out.shape == (B, num_classes), out.shape

    # -------- plain-JAX reference (PyTorch NCDHW layout / flatten order),
    # mirroring the kernels' bf16-input / f32-accumulation numerics --------
    def bf16r(a):
        return a.astype(jnp.bfloat16).astype(jnp.float32)

    ref = lax.conv_general_dilated(
        bf16r(x), bf16r(conv_w), window_strides=(1, 1, 1), padding=[(1, 1)] * 3,
        dimension_numbers=("NCDHW", "OIDHW", "NCDHW"),
        precision=lax.Precision.HIGHEST)
    ref = jnp.maximum(ref + conv_b.reshape(1, -1, 1, 1, 1), 0.0)
    ref = ref.reshape(B, 512, 2, 2, 2, 2, 2, 2).transpose(0, 1, 2, 4, 6, 3, 5, 7)
    ref = ref.reshape(B, 512, 2, 2, 2, 8).max(-1)
    rflat = ref.reshape(B, -1)                                   # torch .view(B, -1) order
    h_ref = jnp.maximum(
        jnp.dot(bf16r(rflat), bf16r(w1).T, precision=lax.Precision.HIGHEST) + b1, 0.0)
    h_ref = jnp.dot(bf16r(h_ref), bf16r(w2).T, precision=lax.Precision.HIGHEST) + b2
    ref_out = jnp.dot(bf16r(jnp.maximum(h_ref, 0.0)), bf16r(w3).T,
                      precision=lax.Precision.HIGHEST) + b3

    max_err = np.max(np.abs(np.asarray(out) - np.asarray(ref_out)))
    assert np.allclose(np.asarray(out), np.asarray(ref_out), rtol=1e-2, atol=1e-3), max_err
    print("KERNEL_OK")
</pallas_src>

<mosaic_0001>
module attributes {stable_mosaic.version = 11 : i64} {
  func.func @kernel(%arg0: i32, %arg1: i32, %arg2: memref<128x128xf32, #tpu.memory_space<vmem>>, %arg3: memref<128x512xbf16, #tpu.memory_space<vmem>>, %arg4: memref<1x512xf32, #tpu.memory_space<vmem>>, %arg5: memref<128x512xf32, #tpu.memory_space<vmem>>) attributes {dimension_semantics = [#tpu.dimension_semantics<parallel>, #tpu.dimension_semantics<parallel>], iteration_bounds = array<i64: 1, 1>, scalar_prefetch = 0 : i64, scratch_operands = 0 : i64, tpu.core_type = #tpu.core_type<tc>, window_params = [{transform_indices = @transform_0, window_bounds = array<i64: 128, 128>}, {transform_indices = @transform_1, window_bounds = array<i64: 128, 512>}, {transform_indices = @transform_2, window_bounds = array<i64: 1, 512>}, {transform_indices = @transform_3, window_bounds = array<i64: 128, 512>}]} {
    %c0 = arith.constant 0 : index
    %c0_0 = arith.constant 0 : index
    %0 = vector.load %arg2[%c0, %c0_0] : memref<128x128xf32, #tpu.memory_space<vmem>>, vector<128x128xf32>
    %1 = arith.truncf %0 : vector<128x128xf32> to vector<128x128xbf16>
    %c0_1 = arith.constant 0 : index
    %c0_2 = arith.constant 0 : index
    %2 = vector.load %arg3[%c0_1, %c0_2] : memref<128x512xbf16, #tpu.memory_space<vmem>>, vector<128x512xbf16>
    %cst = arith.constant dense<0.000000e+00> : vector<128x512xf32>
    %3 = tpu.matmul %1, %2, %cst {dimension_numbers = #tpu.dot_dimension_numbers<[1], [0], [0], [1], [0, 0, 1, 1], [], []>} : vector<128x128xbf16>, vector<128x512xbf16>, vector<128x512xf32> -> vector<128x512xf32>
    %c0_3 = arith.constant 0 : index
    %c0_4 = arith.constant 0 : index
    %4 = vector.load %arg4[%c0_3, %c0_4] : memref<1x512xf32, #tpu.memory_space<vmem>>, vector<1x512xf32>
    %5 = vector.broadcast %4 : vector<1x512xf32> to vector<128x512xf32>
    %6 = arith.addf %3, %5 : vector<128x512xf32>
    %cst_5 = arith.constant 0.000000e+00 : f32
    %7 = vector.broadcast %cst_5 : f32 to vector<128x512xf32>
    %8 = arith.maximumf %6, %7 : vector<128x512xf32>
    %c0_6 = arith.constant 0 : index
    %c0_7 = arith.constant 0 : index
    %9 = vector.load %arg5[%c0_6, %c0_7] : memref<128x512xf32, #tpu.memory_space<vmem>>, vector<128x512xf32>
    tpu.vector_store %arg5[%c0_6, %c0_7], %8 {strides = array<i32>} : memref<128x512xf32, #tpu.memory_space<vmem>>, vector<128x512xf32>,
    return
  }
  func.func @transform_0(%arg0: i32, %arg1: i32) -> (i32, i32) {
    %c0_i32 = arith.constant 0 : i32
    %c0_i32_0 = arith.constant 0 : i32
    return %arg0, %c0_i32 : i32, i32
  }
  func.func @transform_1(%arg0: i32, %arg1: i32) -> (i32, i32) {
    %c0_i32 = arith.constant 0 : i32
    %c0_i32_0 = arith.constant 0 : i32
    return %c0_i32, %arg1 : i32, i32
  }
  func.func @transform_2(%arg0: i32, %arg1: i32) -> (i32, i32) {
    %c0_i32 = arith.constant 0 : i32
    %c0_i32_0 = arith.constant 0 : i32
    return %c0_i32, %arg1 : i32, i32
  }
  func.func @transform_3(%arg0: i32, %arg1: i32) -> (i32, i32) {
    %c0_i32 = arith.constant 0 : i32
    return %arg0, %arg1 : i32, i32
  }
}

</mosaic_0001>

<llo_original>
// kernel: tpu_custom_call.1
$region0: #{tpu_custom_call.1}
  #allocation0 [shape = 'u32[]', space=smem, size = 0x4, offset = 0x4, fixed_abs, tag = 'smem constant byte address 0x4 - core index']
  #allocation1 [shape = 'u32[144,128]{1,0:T(1,128)}', space=vmem, size = 0x12000, scoped, tag = 'internal scratch']
  %s0 = inlined_call_operand.hbm [shape: f32[128,128], index: 0, kind: input, shape index: {}]
  %s1 = inlined_call_operand.hbm [shape: bf16[128,512], index: 1, kind: input, shape index: {}]
  %s2 = inlined_call_operand.hbm [shape: f32[1,512], index: 2, kind: input, shape index: {}]
  %s3 = inlined_call_operand.hbm [shape: f32[128,512], index: 3, kind: output, shape index: {}]
  %s4 = sld [smem:[#allocation0]]
  $region34: #{tpu_custom_call.1} parent=0
    _
  %s6 = ssub.s32 1, %s4
  %s7 = scalar_select 0, %s6, %s4
  $region1: #{tpu_custom_call.1} parent=0
    #allocation2 [shape = 'u8[65536]{0}', space=vmem, size = 0x10000, scoped, tag = 'input window, operand 0, single buffered']
    #allocation3 [shape = 's32[1]{0}', space=sflag, size = 0x4, scoped, tag = 'scoped memory for tpu_custom_call.1']
    #allocation4 [shape = 's32[1]{0}', space=sflag, size = 0x4, scoped, tag = 'scoped memory for tpu_custom_call.1']
    #allocation5 [shape = 'u8[131072]{0}', space=vmem, size = 0x20000, scoped, tag = 'input window, operand 1, single buffered']
    #allocation6 [shape = 's32[1]{0}', space=sflag, size = 0x4, scoped, tag = 'scoped memory for tpu_custom_call.1']
    #allocation7 [shape = 'u8[2048]{0}', space=vmem, size = 0x800, scoped, tag = 'input window, operand 2, single buffered']
    #allocation8 [shape = 'u8[262144]{0}', space=vmem, size = 0x40000, scoped, tag = 'output window, operand 0, single buffered']
    %8 = vsyncpa [#allocation3], 0
    %9 = vsyncpa [#allocation6], 0
    %10 = vsyncpa [#allocation4], 0
    // Predicated region
    $region2: #{tpu_custom_call.1} parent=1 // pred_check
      _
    $region3: #{tpu_custom_call.1} parent=1 // pred_check_branch
      %12 = sbr.rel (0) target = $region5
    $region4: #{tpu_custom_call.1} parent=1 // pred_region
      %s14 = ssub.s32 2048, 2048
      %15 = vsyncadd [#allocation3], %s14
      %s16 = sshll.u32 [#allocation2], 4
      %s17 = int_to_ptr.vmem [resolvable:$true] %s16
      %22 = dma.hbm_to_vmem [thread:$0]  %s0, 2048, %s17, [#allocation3], 128, 128, 8
    $region5: #{tpu_custom_call.1} parent=1 // pred_fallthru
      _
    // Predicated region
    $region6: #{tpu_custom_call.1} parent=1 // pred_check
      _
    $region7: #{tpu_custom_call.1} parent=1 // pred_check_branch
      %24 = sbr.rel (0) target = $region9
    $region8: #{tpu_custom_call.1} parent=1 // pred_region
      %s26 = ssub.s32 4096, 4096
      %27 = vsyncadd [#allocation6], %s26
      %s28 = sshll.u32 [#allocation5], 4
      %s29 = int_to_ptr.vmem [resolvable:$true] %s28
      %34 = dma.hbm_to_vmem [thread:$0]  %s1, 4096, %s29, [#allocation6], 256, 256, 16
    $region9: #{tpu_custom_call.1} parent=1 // pred_fallthru
      _
    // Predicated region
    $region10: #{tpu_custom_call.1} parent=1 // pred_check
      _
    $region11: #{tpu_custom_call.1} parent=1 // pred_check_branch
      %36 = sbr.rel (0) target = $region13
    $region12: #{tpu_custom_call.1} parent=1 // pred_region
      %s38 = ssub.s32 64, 64
      %39 = vsyncadd [#allocation6], %s38
      %s41 = sshll.u32 [#allocation7], 4
      %s42 = int_to_ptr.vmem [resolvable:$true] %s41
      %44 = dma.hbm_to_vmem [thread:$0]  %s2, 64, %s42, [#allocation6]
    $region13: #{tpu_custom_call.1} parent=1 // pred_fallthru
      _
    // Predicated region
    $region14: #{tpu_custom_call.1} parent=1 // pred_check
      _
    $region15: #{tpu_custom_call.1} parent=1 // pred_check_branch
      %46 = sbr.rel (0) target = $region17
    $region16: #{tpu_custom_call.1} parent=1 // pred_region
      %47 = dma.done [#allocation3], 2048
    $region17: #{tpu_custom_call.1} parent=1 // pred_fallthru
      _
    // Predicated region
    $region18: #{tpu_custom_call.1} parent=1 // pred_check
      _
    $region19: #{tpu_custom_call.1} parent=1 // pred_check_branch
      %49 = sbr.rel (0) target = $region21
    $region20: #{tpu_custom_call.1} parent=1 // pred_region
      %50 = dma.done [#allocation6], 4096
    $region21: #{tpu_custom_call.1} parent=1 // pred_fallthru
      _
    // Predicated region
    $region22: #{tpu_custom_call.1} parent=1 // pred_check
      _
    $region23: #{tpu_custom_call.1} parent=1 // pred_check_branch
      %52 = sbr.rel (0) target = $region25
    $region24: #{tpu_custom_call.1} parent=1 // pred_region
      %53 = dma.done [#allocation6], 64
    $region25: #{tpu_custom_call.1} parent=1 // pred_fallthru
      _
    %v55 = vld [vmem:[#allocation2] sm:$0xff]
    %v56 = vld [vmem:[#allocation2 + $0x8] sm:$0xff]
    %v57 = vld [vmem:[#allocation2 + $0x10] sm:$0xff]
    %v58 = vld [vmem:[#allocation2 + $0x18] sm:$0xff]
    %v59 = vld [vmem:[#allocation2 + $0x20] sm:$0xff]
    %v60 = vld [vmem:[#allocation2 + $0x28] sm:$0xff]
    %v61 = vld [vmem:[#allocation2 + $0x30] sm:$0xff]
    %v62 = vld [vmem:[#allocation2 + $0x38] sm:$0xff]
    %v63 = vld [vmem:[#allocation2 + $0x40] sm:$0xff]
    %v64 = vld [vmem:[#allocation2 + $0x48] sm:$0xff]
    %v65 = vld [vmem:[#allocation2 + $0x50] sm:$0xff]
    %v66 = vld [vmem:[#allocation2 + $0x58] sm:$0xff]
    %v67 = vld [vmem:[#allocation2 + $0x60] sm:$0xff]
    %v68 = vld [vmem:[#allocation2 + $0x68] sm:$0xff]
    %v69 = vld [vmem:[#allocation2 + $0x70] sm:$0xff]
    %v70 = vld [vmem:[#allocation2 + $0x78] sm:$0xff]
    %v71 = vpack.c.bf16 %v56, %v55
    %v72 = vpack.c.bf16 %v58, %v57
    %v73 = vpack.c.bf16 %v60, %v59
    %v74 = vpack.c.bf16 %v62, %v61
    %v75 = vpack.c.bf16 %v64, %v63
    %v76 = vpack.c.bf16 %v66, %v65
    %v77 = vpack.c.bf16 %v68, %v67
    %v78 = vpack.c.bf16 %v70, %v69
    %v79 = vld [vmem:[#allocation5] sm:$0xff]
    %v80 = vld [vmem:[#allocation5 + $0x8] sm:$0xff]
    %v81 = vld [vmem:[#allocation5 + $0x10] sm:$0xff]
    %v82 = vld [vmem:[#allocation5 + $0x18] sm:$0xff]
    %v83 = vld [vmem:[#allocation5 + $0x20] sm:$0xff]
    %v84 = vld [vmem:[#allocation5 + $0x28] sm:$0xff]
    %v85 = vld [vmem:[#allocation5 + $0x30] sm:$0xff]
    %v86 = vld [vmem:[#allocation5 + $0x38] sm:$0xff]
    %v87 = vld [vmem:[#allocation5 + $0x40] sm:$0xff]
    %v88 = vld [vmem:[#allocation5 + $0x48] sm:$0xff]
    %v89 = vld [vmem:[#allocation5 + $0x50] sm:$0xff]
    %v90 = vld [vmem:[#allocation5 + $0x58] sm:$0xff]
    %v91 = vld [vmem:[#allocation5 + $0x60] sm:$0xff]
    %v92 = vld [vmem:[#allocation5 + $0x68] sm:$0xff]
    %v93 = vld [vmem:[#allocation5 + $0x70] sm:$0xff]
    %v94 = vld [vmem:[#allocation5 + $0x78] sm:$0xff]
    %v95 = vld [vmem:[#allocation5 + $0x80] sm:$0xff]
    %v96 = vld [vmem:[#allocation5 + $0x88] sm:$0xff]
    %v97 = vld [vmem:[#allocation5 + $0x90] sm:$0xff]
    %v98 = vld [vmem:[#allocation5 + $0x98] sm:$0xff]
    %v99 = vld [vmem:[#allocation5 + $0xa0] sm:$0xff]
    %v100 = vld [vmem:[#allocation5 + $0xa8] sm:$0xff]
    %v101 = vld [vmem:[#allocation5 + $0xb0] sm:$0xff]
    %v102 = vld [vmem:[#allocation5 + $0xb8] sm:$0xff]
    %v103 = vld [vmem:[#allocation5 + $0xc0] sm:$0xff]
    %v104 = vld [vmem:[#allocation5 + $0xc8] sm:$0xff]
    %v105 = vld [vmem:[#allocation5 + $0xd0] sm:$0xff]
    %v106 = vld [vmem:[#allocation5 + $0xd8] sm:$0xff]
    %v107 = vld [vmem:[#allocation5 + $0xe0] sm:$0xff]
    %v108 = vld [vmem:[#allocation5 + $0xe8] sm:$0xff]
    %v109 = vld [vmem:[#allocation5 + $0xf0] sm:$0xff]
    %v110 = vld [vmem:[#allocation5 + $0xf8] sm:$0xff]
    %v111 = vld [vmem:[#allocation7] sm:$0xf]
    %v113 = vlaneseq
    %v114 = vshrl.u32 %v113, 7
    %v115 = vsub.s32 0, %v114
    %v116 = vrot.slane %v111, %v115
    %v117 = vlaneseq
    %v118 = vshrl.u32 %v117, 7
    %v119 = vsub.s32 1, %v118
    %v120 = vrot.slane %v111, %v119
    %v121 = vlaneseq
    %v122 = vshrl.u32 %v121, 7
    %v123 = vsub.s32 2, %v122
    %v124 = vrot.slane %v111, %v123
    %v125 = vlaneseq
    %v126 = vshrl.u32 %v125, 7
    %v127 = vsub.s32 3, %v126
    %v128 = vrot.slane %v111, %v127
    %v165 = vunpack.c.l.b16 %v79
    %v166 = vunpack.c.h.b16 %v79
    %v167 = vunpack.c.l.b16 %v80
    %v168 = vunpack.c.h.b16 %v80
    %v169 = vunpack.c.l.b16 %v81
    %v170 = vunpack.c.h.b16 %v81
    %v171 = vunpack.c.l.b16 %v82
    %v172 = vunpack.c.h.b16 %v82
    %v173 = vunpack.c.l.b16 %v83
    %v174 = vunpack.c.h.b16 %v83
    %v175 = vunpack.c.l.b16 %v84
    %v176 = vunpack.c.h.b16 %v84
    %v177 = vunpack.c.l.b16 %v85
    %v178 = vunpack.c.h.b16 %v85
    %v179 = vunpack.c.l.b16 %v86
    %v180 = vunpack.c.h.b16 %v86
    %v181 = vunpack.c.l.b16 %v87
    %v182 = vunpack.c.h.b16 %v87
    %v183 = vunpack.c.l.b16 %v88
    %v184 = vunpack.c.h.b16 %v88
    %v185 = vunpack.c.l.b16 %v89
    %v186 = vunpack.c.h.b16 %v89
    %v187 = vunpack.c.l.b16 %v90
    %v188 = vunpack.c.h.b16 %v90
    %v189 = vunpack.c.l.b16 %v91
    %v190 = vunpack.c.h.b16 %v91
    %v191 = vunpack.c.l.b16 %v92
    %v192 = vunpack.c.h.b16 %v92
    %v193 = vunpack.c.l.b16 %v93
    %v194 = vunpack.c.h.b16 %v93
    %v195 = vunpack.c.l.b16 %v94
    %v196 = vunpack.c.h.b16 %v94
    %v197 = vunpack.c.l.b16 %v95
    %v198 = vunpack.c.h.b16 %v95
    %v199 = vunpack.c.l.b16 %v96
    %v200 = vunpack.c.h.b16 %v96
    %v201 = vunpack.c.l.b16 %v97
    %v202 = vunpack.c.h.b16 %v97
    %v203 = vunpack.c.l.b16 %v98
    %v204 = vunpack.c.h.b16 %v98
    %v205 = vunpack.c.l.b16 %v99
    %v206 = vunpack.c.h.b16 %v99
    %v207 = vunpack.c.l.b16 %v100
    %v208 = vunpack.c.h.b16 %v100
    %v209 = vunpack.c.l.b16 %v101
    %v210 = vunpack.c.h.b16 %v101
    %v211 = vunpack.c.l.b16 %v102
    %v212 = vunpack.c.h.b16 %v102
    %v213 = vunpack.c.l.b16 %v103
    %v214 = vunpack.c.h.b16 %v103
    %v215 = vunpack.c.l.b16 %v104
    %v216 = vunpack.c.h.b16 %v104
    %v217 = vunpack.c.l.b16 %v105
    %v218 = vunpack.c.h.b16 %v105
    %v219 = vunpack.c.l.b16 %v106
    %v220 = vunpack.c.h.b16 %v106
    %v221 = vunpack.c.l.b16 %v107
    %v222 = vunpack.c.h.b16 %v107
    %v223 = vunpack.c.l.b16 %v108
    %v224 = vunpack.c.h.b16 %v108
    %v225 = vunpack.c.l.b16 %v109
    %v226 = vunpack.c.h.b16 %v109
    %v227 = vunpack.c.l.b16 %v110
    %v228 = vunpack.c.h.b16 %v110
    %v229 = vpack.c.b16 %v169, %v165
    %v230 = vpack.c.b16 %v170, %v166
    %v231 = vpack.c.b16 %v171, %v167
    %v232 = vpack.c.b16 %v172, %v168
    %v233 = vpack.c.b16 %v177, %v173
    %v234 = vpack.c.b16 %v178, %v174
    %v235 = vpack.c.b16 %v179, %v175
    %v236 = vpack.c.b16 %v180, %v176
    %v237 = vpack.c.b16 %v185, %v181
    %v238 = vpack.c.b16 %v186, %v182
    %v239 = vpack.c.b16 %v187, %v183
    %v240 = vpack.c.b16 %v188, %v184
    %v241 = vpack.c.b16 %v193, %v189
    %v242 = vpack.c.b16 %v194, %v190
    %v243 = vpack.c.b16 %v195, %v191
    %v244 = vpack.c.b16 %v196, %v192
    %v245 = vpack.c.b16 %v201, %v197
    %v246 = vpack.c.b16 %v202, %v198
    %v247 = vpack.c.b16 %v203, %v199
    %v248 = vpack.c.b16 %v204, %v200
    %v249 = vpack.c.b16 %v209, %v205
    %v250 = vpack.c.b16 %v210, %v206
    %v251 = vpack.c.b16 %v211, %v207
    %v252 = vpack.c.b16 %v212, %v208
    %v253 = vpack.c.b16 %v217, %v213
    %v254 = vpack.c.b16 %v218, %v214
    %v255 = vpack.c.b16 %v219, %v215
    %v256 = vpack.c.b16 %v220, %v216
    %v257 = vpack.c.b16 %v225, %v221
    %v258 = vpack.c.b16 %v226, %v222
    %v259 = vpack.c.b16 %v227, %v223
    %v260 = vpack.c.b16 %v228, %v224
    %293 = vmatprep.subr.bf16.mxu0 %v258
    %294 = vmatpush1.bf16.msra.mxu0 %v257
    %295 = vmatprep.subr.bf16.mxu0 %v254
    %296 = vmatpush1.bf16.msra.mxu0 %v253
    %297 = vmatprep.subr.bf16.mxu0 %v250
    %298 = vmatpush1.bf16.msra.mxu0 %v249
    %299 = vmatprep.subr.bf16.mxu0 %v246
    %300 = vmatpush1.bf16.msra.mxu0 %v245
    %301 = vmatprep.subr.bf16.mxu0 %v242
    %302 = vmatpush1.bf16.msra.mxu0 %v241
    %303 = vmatprep.subr.bf16.mxu0 %v238
    %304 = vmatpush1.bf16.msra.mxu0 %v237
    %305 = vmatprep.subr.bf16.mxu0 %v234
    %306 = vmatpush1.bf16.msra.mxu0 %v233
    %307 = vmatprep.subr.bf16.mxu0 %v230
    %308 = vmatpush1.bf16.msra.mxu0 %v229
    %309 = vmatprep.subr.bf16.mxu0 0
    %310 = vmatpush2.bf16.msra.mxu0 0
    %311 = vmatprep.subr.bf16.mxu0 0
    %312 = vmatpush2.bf16.msra.mxu0 0
    %313 = vmatprep.subr.bf16.mxu0 0
    %314 = vmatpush2.bf16.msra.mxu0 0
    %315 = vmatprep.subr.bf16.mxu0 0
    %316 = vmatpush2.bf16.msra.mxu0 0
    %317 = vmatprep.subr.bf16.mxu0 0
    %318 = vmatpush2.bf16.msra.mxu0 0
    %319 = vmatprep.subr.bf16.mxu0 0
    %320 = vmatpush2.bf16.msra.mxu0 0
    %321 = vmatprep.subr.bf16.mxu0 0
    %322 = vmatpush2.bf16.msra.mxu0 0
    %323 = vmatprep.subr.bf16.mxu0 0
    %324 = vmatpush2.bf16.msra.mxu0 0
    %325 = vmatprep.mubr.bf16.mxu0 0
    %326 = vmatmul.mubr.bf16.gmra.mxu0 %v71
    %v327 = vpop.f32.mrf.mxu0
    %v328 = vadd.f32 %v116, %v327
    %v329 = vpop.f32.mrf.mxu0
    %v330 = vadd.f32 %v120, %v329
    %v331 = vpop.f32.mrf.mxu0
    %v332 = vadd.f32 %v116, %v331
    %v333 = vpop.f32.mrf.mxu0
    %v334 = vadd.f32 %v120, %v333
    %335 = vmatprep.mubr.bf16.mxu0 0
    %336 = vmatmul.mubr.bf16.gmra.mxu0 %v72
    %v337 = vpop.f32.mrf.mxu0
    %v338 = vadd.f32 %v116, %v337
    %v339 = vpop.f32.mrf.mxu0
    %v340 = vadd.f32 %v120, %v339
    %v341 = vpop.f32.mrf.mxu0
    %v342 = vadd.f32 %v116, %v341
    %v343 = vpop.f32.mrf.mxu0
    %v344 = vadd.f32 %v120, %v343
    %345 = vmatprep.mubr.bf16.mxu0 0
    %346 = vmatmul.mubr.bf16.gmra.mxu0 %v73
    %v347 = vpop.f32.mrf.mxu0
    %v348 = vadd.f32 %v116, %v347
    %v349 = vpop.f32.mrf.mxu0
    %v350 = vadd.f32 %v120, %v349
    %v351 = vpop.f32.mrf.mxu0
    %v352 = vadd.f32 %v116, %v351
    %v353 = vpop.f32.mrf.mxu0
    %v354 = vadd.f32 %v120, %v353
    %355 = vmatprep.mubr.bf16.mxu0 0
    %356 = vmatmul.mubr.bf16.gmra.mxu0 %v74
    %v357 = vpop.f32.mrf.mxu0
    %v358 = vadd.f32 %v116, %v357
    %v359 = vpop.f32.mrf.mxu0
    %v360 = vadd.f32 %v120, %v359
    %v361 = vpop.f32.mrf.mxu0
    %v362 = vadd.f32 %v116, %v361
    %v363 = vpop.f32.mrf.mxu0
    %v364 = vadd.f32 %v120, %v363
    %365 = vmatprep.mubr.bf16.mxu0 0
    %366 = vmatmul.mubr.bf16.gmra.mxu0 %v75
    %v367 = vpop.f32.mrf.mxu0
    %v368 = vadd.f32 %v116, %v367
    %v369 = vpop.f32.mrf.mxu0
    %v370 = vadd.f32 %v120, %v369
    %v371 = vpop.f32.mrf.mxu0
    %v372 = vadd.f32 %v116, %v371
    %v373 = vpop.f32.mrf.mxu0
    %v374 = vadd.f32 %v120, %v373
    %375 = vmatprep.mubr.bf16.mxu0 0
    %376 = vmatmul.mubr.bf16.gmra.mxu0 %v76
    %v377 = vpop.f32.mrf.mxu0
    %v378 = vadd.f32 %v116, %v377
    %v379 = vpop.f32.mrf.mxu0
    %v380 = vadd.f32 %v120, %v379
    %v381 = vpop.f32.mrf.mxu0
    %v382 = vadd.f32 %v116, %v381
    %v383 = vpop.f32.mrf.mxu0
    %v384 = vadd.f32 %v120, %v383
    %385 = vmatprep.mubr.bf16.mxu0 0
    %386 = vmatmul.mubr.bf16.gmra.mxu0 %v77
    %v387 = vpop.f32.mrf.mxu0
    %v388 = vadd.f32 %v116, %v387
    %v389 = vpop.f32.mrf.mxu0
    %v390 = vadd.f32 %v120, %v389
    %v391 = vpop.f32.mrf.mxu0
    %v392 = vadd.f32 %v116, %v391
    %v393 = vpop.f32.mrf.mxu0
    %v394 = vadd.f32 %v120, %v393
    %395 = vmatprep.mubr.bf16.mxu0 0
    %396 = vmatmul.mubr.bf16.gmra.mxu0 %v78
    %v397 = vpop.f32.mrf.mxu0
    %v398 = vadd.f32 %v116, %v397
    %v399 = vpop.f32.mrf.mxu0
    %v400 = vadd.f32 %v120, %v399
    %v401 = vpop.f32.mrf.mxu0
    %v402 = vadd.f32 %v116, %v401
    %v403 = vpop.f32.mrf.mxu0
    %v404 = vadd.f32 %v120, %v403
    %405 = vdwg.mxu0
    %406 = vmatprep.subr.bf16.mxu0 %v260
    %407 = vmatpush1.bf16.msra.mxu0 %v259
    %408 = vmatprep.subr.bf16.mxu0 %v256
    %409 = vmatpush1.bf16.msra.mxu0 %v255
    %410 = vmatprep.subr.bf16.mxu0 %v252
    %411 = vmatpush1.bf16.msra.mxu0 %v251
    %412 = vmatprep.subr.bf16.mxu0 %v248
    %413 = vmatpush1.bf16.msra.mxu0 %v247
    %414 = vmatprep.subr.bf16.mxu0 %v244
    %415 = vmatpush1.bf16.msra.mxu0 %v243
    %416 = vmatprep.subr.bf16.mxu0 %v240
    %417 = vmatpush1.bf16.msra.mxu0 %v239
    %418 = vmatprep.subr.bf16.mxu0 %v236
    %419 = vmatpush1.bf16.msra.mxu0 %v235
    %420 = vmatprep.subr.bf16.mxu0 %v232
    %421 = vmatpush1.bf16.msra.mxu0 %v231
    %422 = vmatprep.subr.bf16.mxu0 0
    %423 = vmatpush2.bf16.msra.mxu0 0
    %424 = vmatprep.subr.bf16.mxu0 0
    %425 = vmatpush2.bf16.msra.mxu0 0
    %426 = vmatprep.subr.bf16.mxu0 0
    %427 = vmatpush2.bf16.msra.mxu0 0
    %428 = vmatprep.subr.bf16.mxu0 0
    %429 = vmatpush2.bf16.msra.mxu0 0
    %430 = vmatprep.subr.bf16.mxu0 0
    %431 = vmatpush2.bf16.msra.mxu0 0
    %432 = vmatprep.subr.bf16.mxu0 0
    %433 = vmatpush2.bf16.msra.mxu0 0
    %434 = vmatprep.subr.bf16.mxu0 0
    %435 = vmatpush2.bf16.msra.mxu0 0
    %436 = vmatprep.subr.bf16.mxu0 0
    %437 = vmatpush2.bf16.msra.mxu0 0
    %438 = vmatprep.mubr.bf16.mxu0 0
    %439 = vmatmul.mubr.bf16.gmra.mxu0 %v71
    %v440 = vpop.f32.mrf.mxu0
    %v441 = vadd.f32 %v124, %v440
    %v442 = vpop.f32.mrf.mxu0
    %v443 = vadd.f32 %v128, %v442
    %v444 = vpop.f32.mrf.mxu0
    %v445 = vadd.f32 %v124, %v444
    %v446 = vpop.f32.mrf.mxu0
    %v447 = vadd.f32 %v128, %v446
    %448 = vmatprep.mubr.bf16.mxu0 0
    %449 = vmatmul.mubr.bf16.gmra.mxu0 %v72
    %v450 = vpop.f32.mrf.mxu0
    %v451 = vadd.f32 %v124, %v450
    %v452 = vpop.f32.mrf.mxu0
    %v453 = vadd.f32 %v128, %v452
    %v454 = vpop.f32.mrf.mxu0
    %v455 = vadd.f32 %v124, %v454
    %v456 = vpop.f32.mrf.mxu0
    %v457 = vadd.f32 %v128, %v456
    %458 = vmatprep.mubr.bf16.mxu0 0
    %459 = vmatmul.mubr.bf16.gmra.mxu0 %v73
    %v460 = vpop.f32.mrf.mxu0
    %v461 = vadd.f32 %v124, %v460
    %v462 = vpop.f32.mrf.mxu0
    %v463 = vadd.f32 %v128, %v462
    %v464 = vpop.f32.mrf.mxu0
    %v465 = vadd.f32 %v124, %v464
    %v466 = vpop.f32.mrf.mxu0
    %v467 = vadd.f32 %v128, %v466
    %468 = vmatprep.mubr.bf16.mxu0 0
    %469 = vmatmul.mubr.bf16.gmra.mxu0 %v74
    %v470 = vpop.f32.mrf.mxu0
    %v471 = vadd.f32 %v124, %v470
    %v472 = vpop.f32.mrf.mxu0
    %v473 = vadd.f32 %v128, %v472
    %v474 = vpop.f32.mrf.mxu0
    %v475 = vadd.f32 %v124, %v474
    %v476 = vpop.f32.mrf.mxu0
    %v477 = vadd.f32 %v128, %v476
    %478 = vmatprep.mubr.bf16.mxu0 0
    %479 = vmatmul.mubr.bf16.gmra.mxu0 %v75
    %v480 = vpop.f32.mrf.mxu0
    %v481 = vadd.f32 %v124, %v480
    %v482 = vpop.f32.mrf.mxu0
    %v483 = vadd.f32 %v128, %v482
    %v484 = vpop.f32.mrf.mxu0
    %v485 = vadd.f32 %v124, %v484
    %v486 = vpop.f32.mrf.mxu0
    %v487 = vadd.f32 %v128, %v486
    %488 = vmatprep.mubr.bf16.mxu0 0
    %489 = vmatmul.mubr.bf16.gmra.mxu0 %v76
    %v490 = vpop.f32.mrf.mxu0
    %v491 = vadd.f32 %v124, %v490
    %v492 = vpop.f32.mrf.mxu0
    %v493 = vadd.f32 %v128, %v492
    %v494 = vpop.f32.mrf.mxu0
    %v495 = vadd.f32 %v124, %v494
    %v496 = vpop.f32.mrf.mxu0
    %v497 = vadd.f32 %v128, %v496
    %498 = vmatprep.mubr.bf16.mxu0 0
    %499 = vmatmul.mubr.bf16.gmra.mxu0 %v77
    %v500 = vpop.f32.mrf.mxu0
    %v501 = vadd.f32 %v124, %v500
    %v502 = vpop.f32.mrf.mxu0
    %v503 = vadd.f32 %v128, %v502
    %v504 = vpop.f32.mrf.mxu0
    %v505 = vadd.f32 %v124, %v504
    %v506 = vpop.f32.mrf.mxu0
    %v507 = vadd.f32 %v128, %v506
    %508 = vmatprep.mubr.bf16.mxu0 0
    %509 = vmatmul.mubr.bf16.gmra.mxu0 %v78
    %v510 = vpop.f32.mrf.mxu0
    %v511 = vadd.f32 %v124, %v510
    %v512 = vpop.f32.mrf.mxu0
    %v513 = vadd.f32 %v128, %v512
    %v514 = vpop.f32.mrf.mxu0
    %v515 = vadd.f32 %v124, %v514
    %v516 = vpop.f32.mrf.mxu0
    %v517 = vadd.f32 %v128, %v516
    %518 = vdwg.mxu0
    %v519 = vmax.f32 %v328, 0.0
    %v520 = vmax.f32 %v330, 0.0
    %v521 = vmax.f32 %v441, 0.0
    %v522 = vmax.f32 %v443, 0.0
    %v523 = vmax.f32 %v332, 0.0
    %v524 = vmax.f32 %v334, 0.0
    %v525 = vmax.f32 %v445, 0.0
    %v526 = vmax.f32 %v447, 0.0
    %v527 = vmax.f32 %v338, 0.0
    %v528 = vmax.f32 %v340, 0.0
    %v529 = vmax.f32 %v451, 0.0
    %v530 = vmax.f32 %v453, 0.0
    %v531 = vmax.f32 %v342, 0.0
    %v532 = vmax.f32 %v344, 0.0
    %v533 = vmax.f32 %v455, 0.0
    %v534 = vmax.f32 %v457, 0.0
    %v535 = vmax.f32 %v348, 0.0
    %v536 = vmax.f32 %v350, 0.0
    %v537 = vmax.f32 %v461, 0.0
    %v538 = vmax.f32 %v463, 0.0
    %v539 = vmax.f32 %v352, 0.0
    %v540 = vmax.f32 %v354, 0.0
    %v541 = vmax.f32 %v465, 0.0
    %v542 = vmax.f32 %v467, 0.0
    %v543 = vmax.f32 %v358, 0.0
    %v544 = vmax.f32 %v360, 0.0
    %v545 = vmax.f32 %v471, 0.0
    %v546 = vmax.f32 %v473, 0.0
    %v547 = vmax.f32 %v362, 0.0
    %v548 = vmax.f32 %v364, 0.0
    %v549 = vmax.f32 %v475, 0.0
    %v550 = vmax.f32 %v477, 0.0
    %v551 = vmax.f32 %v368, 0.0
    %v552 = vmax.f32 %v370, 0.0
    %v553 = vmax.f32 %v481, 0.0
    %v554 = vmax.f32 %v483, 0.0
    %v555 = vmax.f32 %v372, 0.0
    %v556 = vmax.f32 %v374, 0.0
    %v557 = vmax.f32 %v485, 0.0
    %v558 = vmax.f32 %v487, 0.0
    %v559 = vmax.f32 %v378, 0.0
    %v560 = vmax.f32 %v380, 0.0
    %v561 = vmax.f32 %v491, 0.0
    %v562 = vmax.f32 %v493, 0.0
    %v563 = vmax.f32 %v382, 0.0
    %v564 = vmax.f32 %v384, 0.0
    %v565 = vmax.f32 %v495, 0.0
    %v566 = vmax.f32 %v497, 0.0
    %v567 = vmax.f32 %v388, 0.0
    %v568 = vmax.f32 %v390, 0.0
    %v569 = vmax.f32 %v501, 0.0
    %v570 = vmax.f32 %v503, 0.0
    %v571 = vmax.f32 %v392, 0.0
    %v572 = vmax.f32 %v394, 0.0
    %v573 = vmax.f32 %v505, 0.0
    %v574 = vmax.f32 %v507, 0.0
    %v575 = vmax.f32 %v398, 0.0
    %v576 = vmax.f32 %v400, 0.0
    %v577 = vmax.f32 %v511, 0.0
    %v578 = vmax.f32 %v513, 0.0
    %v579 = vmax.f32 %v402, 0.0
    %v580 = vmax.f32 %v404, 0.0
    %v581 = vmax.f32 %v515, 0.0
    %v582 = vmax.f32 %v517, 0.0
    %583 = vst [vmem:[#allocation8] sm:$0xff] %v519
    %584 = vst [vmem:[#allocation8 + $0x8] sm:$0xff] %v520
    %585 = vst [vmem:[#allocation8 + $0x10] sm:$0xff] %v521
    %586 = vst [vmem:[#allocation8 + $0x18] sm:$0xff] %v522
    %587 = vst [vmem:[#allocation8 + $0x20] sm:$0xff] %v523
    %588 = vst [vmem:[#allocation8 + $0x28] sm:$0xff] %v524
    %589 = vst [vmem:[#allocation8 + $0x30] sm:$0xff] %v525
    %590 = vst [vmem:[#allocation8 + $0x38] sm:$0xff] %v526
    %591 = vst [vmem:[#allocation8 + $0x40] sm:$0xff] %v527
    %592 = vst [vmem:[#allocation8 + $0x48] sm:$0xff] %v528
    %593 = vst [vmem:[#allocation8 + $0x50] sm:$0xff] %v529
    %594 = vst [vmem:[#allocation8 + $0x58] sm:$0xff] %v530
    %595 = vst [vmem:[#allocation8 + $0x60] sm:$0xff] %v531
    %596 = vst [vmem:[#allocation8 + $0x68] sm:$0xff] %v532
    %597 = vst [vmem:[#allocation8 + $0x70] sm:$0xff] %v533
    %598 = vst [vmem:[#allocation8 + $0x78] sm:$0xff] %v534
    %599 = vst [vmem:[#allocation8 + $0x80] sm:$0xff] %v535
    %600 = vst [vmem:[#allocation8 + $0x88] sm:$0xff] %v536
    %601 = vst [vmem:[#allocation8 + $0x90] sm:$0xff] %v537
    %602 = vst [vmem:[#allocation8 + $0x98] sm:$0xff] %v538
    %603 = vst [vmem:[#allocation8 + $0xa0] sm:$0xff] %v539
    %604 = vst [vmem:[#allocation8 + $0xa8] sm:$0xff] %v540
    %605 = vst [vmem:[#allocation8 + $0xb0] sm:$0xff] %v541
    %606 = vst [vmem:[#allocation8 + $0xb8] sm:$0xff] %v542
    %607 = vst [vmem:[#allocation8 + $0xc0] sm:$0xff] %v543
    %608 = vst [vmem:[#allocation8 + $0xc8] sm:$0xff] %v544
    %609 = vst [vmem:[#allocation8 + $0xd0] sm:$0xff] %v545
    %610 = vst [vmem:[#allocation8 + $0xd8] sm:$0xff] %v546
    %611 = vst [vmem:[#allocation8 + $0xe0] sm:$0xff] %v547
    %612 = vst [vmem:[#allocation8 + $0xe8] sm:$0xff] %v548
    %613 = vst [vmem:[#allocation8 + $0xf0] sm:$0xff] %v549
    %614 = vst [vmem:[#allocation8 + $0xf8] sm:$0xff] %v550
    %615 = vst [vmem:[#allocation8 + $0x100] sm:$0xff] %v551
    %616 = vst [vmem:[#allocation8 + $0x108] sm:$0xff] %v552
    %617 = vst [vmem:[#allocation8 + $0x110] sm:$0xff] %v553
    %618 = vst [vmem:[#allocation8 + $0x118] sm:$0xff] %v554
    %619 = vst [vmem:[#allocation8 + $0x120] sm:$0xff] %v555
    %620 = vst [vmem:[#allocation8 + $0x128] sm:$0xff] %v556
    %621 = vst [vmem:[#allocation8 + $0x130] sm:$0xff] %v557
    %622 = vst [vmem:[#allocation8 + $0x138] sm:$0xff] %v558
    %623 = vst [vmem:[#allocation8 + $0x140] sm:$0xff] %v559
    %624 = vst [vmem:[#allocation8 + $0x148] sm:$0xff] %v560
    %625 = vst [vmem:[#allocation8 + $0x150] sm:$0xff] %v561
    %626 = vst [vmem:[#allocation8 + $0x158] sm:$0xff] %v562
    %627 = vst [vmem:[#allocation8 + $0x160] sm:$0xff] %v563
    %628 = vst [vmem:[#allocation8 + $0x168] sm:$0xff] %v564
    %629 = vst [vmem:[#allocation8 + $0x170] sm:$0xff] %v565
    %630 = vst [vmem:[#allocation8 + $0x178] sm:$0xff] %v566
    %631 = vst [vmem:[#allocation8 + $0x180] sm:$0xff] %v567
    %632 = vst [vmem:[#allocation8 + $0x188] sm:$0xff] %v568
    %633 = vst [vmem:[#allocation8 + $0x190] sm:$0xff] %v569
    %634 = vst [vmem:[#allocation8 + $0x198] sm:$0xff] %v570
    %635 = vst [vmem:[#allocation8 + $0x1a0] sm:$0xff] %v571
    %636 = vst [vmem:[#allocation8 + $0x1a8] sm:$0xff] %v572
    %637 = vst [vmem:[#allocation8 + $0x1b0] sm:$0xff] %v573
    %638 = vst [vmem:[#allocation8 + $0x1b8] sm:$0xff] %v574
    %639 = vst [vmem:[#allocation8 + $0x1c0] sm:$0xff] %v575
    %640 = vst [vmem:[#allocation8 + $0x1c8] sm:$0xff] %v576
    %641 = vst [vmem:[#allocation8 + $0x1d0] sm:$0xff] %v577
    %642 = vst [vmem:[#allocation8 + $0x1d8] sm:$0xff] %v578
    %643 = vst [vmem:[#allocation8 + $0x1e0] sm:$0xff] %v579
    %644 = vst [vmem:[#allocation8 + $0x1e8] sm:$0xff] %v580
    %645 = vst [vmem:[#allocation8 + $0x1f0] sm:$0xff] %v581
    %646 = vst [vmem:[#allocation8 + $0x1f8] sm:$0xff] %v582
    // Predicated region
    $region26: #{tpu_custom_call.1} parent=1 // pred_check
      _
    $region27: #{tpu_custom_call.1} parent=1 // pred_check_branch
      %648 = sbr.rel (0) target = $region29
    $region28: #{tpu_custom_call.1} parent=1 // pred_region
      %s650 = ssub.s32 8192, 8192
      %651 = vsyncadd [#allocation4], %s650
      %s652 = sshll.u32 [#allocation8], 4
      %s653 = int_to_ptr.vmem [resolvable:$true] %s652
      %658 = dma.vmem_to_hbm [thread:$0]  %s653, 8192, %s3, [#allocation4], 512, 512, 32
    $region29: #{tpu_custom_call.1} parent=1 // pred_fallthru
      _
    // Predicated region
    $region30: #{tpu_custom_call.1} parent=1 // pred_check
      _
    $region31: #{tpu_custom_call.1} parent=1 // pred_check_branch
      %660 = sbr.rel (0) target = $region33
    $region32: #{tpu_custom_call.1} parent=1 // pred_region
      %661 = dma.done [#allocation4], 8192
    $region33: #{tpu_custom_call.1} parent=1 // pred_fallthru
      _
    %662 = vsyncpa [#allocation3], 1
    %663 = vsyncpa [#allocation6], 1
    %664 = vsyncpa [#allocation4], 1

</llo_original>
